<compile_context>
chip_gen: v7x
topology: tpu7x:2x2x1
jax: 0.10.0
libtpu: 0.0.40
codegen_flags: <defaults>
</compile_context>

<pallas_src>
import functools

import jax
import jax.numpy as jnp
from jax.experimental import pallas as pl
from jax.experimental.pallas import tpu as pltpu  # noqa: F401  (TPU backend)

LANES = 128  # fused output slab width = one lane-dense vreg tile


def nascell_kernel(ps_ref, pp_ref, w_top_ref, w_bot_ref, b_ref,
                   ns_ref, probs_ref, *, state_size, output_size):
    S, O = state_size, output_size

    # Fused linear for both heads, split over the concat (K) axis so no
    # host-side concat / transpose is needed:
    #   y = [ps | pp] @ [W_ns^T | W_pp^T | 0_pad]  =  ps @ W_top + pp @ W_bot
    y = jnp.dot(ps_ref[...], w_top_ref[...], preferred_element_type=jnp.float32)
    y = y + jnp.dot(pp_ref[...], w_bot_ref[...], preferred_element_type=jnp.float32)
    y = y + b_ref[...]                                   # [B, 128], f32

    # next_state = relu(Linear_ns(x))  -> fused columns [0, S)
    ns_ref[...] = jnp.maximum(y[:, :S], 0.0).astype(ns_ref.dtype)

    # predicted_probabilities = softmax(Linear_pp(x), dim=1)
    #   -> fused columns [S, S+O); padding columns are never touched.
    logits = y[:, S:S + O]                               # [B, O]
    m = jnp.max(logits, axis=-1, keepdims=True)
    e = jnp.exp(logits - m)
    denom = jnp.sum(e, axis=-1, keepdims=True)
    inv = pl.reciprocal(denom, approx=True)              # EUP reciprocal
    probs_ref[...] = (e * inv).astype(probs_ref.dtype)


def pack_params(params, dtype=jnp.float32):
    """One-time weight preparation (NOT per step).

    Fuses both nn.Linear layers (PyTorch [out, in] layout) into a single
    lane-dense [2S, 128] slab, then splits it into the two K-halves that
    multiply previous_state / previous_prediction respectively.
    """
    w_ns = jnp.asarray(params["w_ns"])      # [S, 2S]
    b_ns = jnp.asarray(params["b_ns"])      # [S]
    w_pp = jnp.asarray(params["w_pp"])      # [O, 2S]
    b_pp = jnp.asarray(params["b_pp"])      # [O]

    S = w_ns.shape[0]
    O = w_pp.shape[0]
    assert w_ns.shape[1] == 2 * S and w_pp.shape[1] == 2 * S
    assert S + O <= LANES, "fused output width must fit one 128-lane slab"

    pad = LANES - (S + O)
    w_fused = jnp.concatenate([w_ns.T, w_pp.T], axis=1)          # [2S, S+O]
    w_fused = jnp.pad(w_fused, ((0, 0), (0, pad)))               # [2S, 128]
    b_fused = jnp.concatenate([b_ns, b_pp], axis=0)
    b_fused = jnp.pad(b_fused, (0, pad))[None, :]                # [1, 128]

    return {
        "w_top": w_fused[:S].astype(dtype),      # multiplies previous_state
        "w_bot": w_fused[S:].astype(dtype),      # multiplies previous_prediction
        "b_fused": b_fused.astype(jnp.float32),
        "state_size": int(S),
        "output_size": int(O),
    }


@functools.partial(jax.jit, static_argnames=("state_size", "output_size"))
def _nascell_call(previous_state, previous_prediction, w_top, w_bot, b_fused,
                  *, state_size, output_size):
    B, S = previous_state.shape
    O = output_size
    assert S == state_size

    full = lambda shape: pl.BlockSpec(shape, lambda: (0,) * len(shape))
    kernel = functools.partial(
        nascell_kernel, state_size=state_size, output_size=output_size)

    return pl.pallas_call(
        kernel,
        out_shape=(
            jax.ShapeDtypeStruct((B, S), previous_state.dtype),
            jax.ShapeDtypeStruct((B, O), previous_state.dtype),
        ),
        grid=(),
        in_specs=[
            full((B, S)),            # previous_state
            full((B, S)),            # previous_prediction
            full((S, LANES)),        # W_top  (fused, lane-dense)
            full((S, LANES)),        # W_bot
            full((1, LANES)),        # fused bias
        ],
        out_specs=(
            full((B, S)),
            full((B, O)),
        ),
    )(previous_state, previous_prediction, w_top, w_bot, b_fused)


def nascell_layer(previous_state, previous_prediction, packed):
    """Pallas implementation of NASCell_Layer.forward (single step)."""
    return _nascell_call(
        previous_state, previous_prediction,
        packed["w_top"], packed["w_bot"], packed["b_fused"],
        state_size=packed["state_size"], output_size=packed["output_size"])


def _ref_forward(previous_state, previous_prediction, params):
    """Pure-JAX reference mirroring the PyTorch forward."""
    x = jnp.concatenate([previous_state, previous_prediction], axis=1)
    ns = jnp.maximum(x @ params["w_ns"].T + params["b_ns"], 0.0)
    logits = x @ params["w_pp"].T + params["b_pp"]
    probs = jax.nn.softmax(logits, axis=1)
    return ns, probs


if __name__ == "__main__":
    # Small shapes consistent with the module.
    batch = 2
    state_size = 32
    output_size = 8

    key = jax.random.PRNGKey(0)
    k1, k2, k3, k4, k5, k6 = jax.random.split(key, 6)

    # Deterministic synthetic parameters (PyTorch nn.Linear layout).
    params = {
        "w_ns": 0.1 * jax.random.normal(k1, (state_size, 2 * state_size), jnp.float32),
        "b_ns": 0.1 * jax.random.normal(k2, (state_size,), jnp.float32),
        "w_pp": 0.1 * jax.random.normal(k3, (output_size, 2 * state_size), jnp.float32),
        "b_pp": 0.1 * jax.random.normal(k4, (output_size,), jnp.float32),
    }

    previous_state = jax.random.normal(k5, (batch, state_size), jnp.float32)
    previous_prediction = jax.random.normal(k6, (batch, state_size), jnp.float32)

    # One-time weight packing (amortized across all controller steps).
    packed = pack_params(params)

    next_state, probs = nascell_layer(previous_state, previous_prediction, packed)
    jax.block_until_ready((next_state, probs))

    # Sanity-check against the pure-JAX reference.
    ns_ref, pp_ref = _ref_forward(previous_state, previous_prediction, params)
    # next_state: only f32 summation-order differences.
    assert jnp.allclose(next_state, ns_ref, atol=1e-4, rtol=1e-4)
    # probs: slightly looser tolerance because the softmax normalization uses
    # the EUP approximate reciprocal (pl.reciprocal(approx=True)).
    assert jnp.allclose(probs, pp_ref, atol=2e-3, rtol=0)
    assert jnp.allclose(jnp.sum(probs, axis=1), 1.0, atol=2e-3)

    print("KERNEL_OK")
</pallas_src>

<mosaic_0001>
module attributes {stable_mosaic.version = 11 : i64} {
  func.func @nascell_kernel(%arg0: memref<2x32xf32, #tpu.memory_space<vmem>>, %arg1: memref<2x32xf32, #tpu.memory_space<vmem>>, %arg2: memref<32x128xf32, #tpu.memory_space<vmem>>, %arg3: memref<32x128xf32, #tpu.memory_space<vmem>>, %arg4: memref<1x128xf32, #tpu.memory_space<vmem>>, %arg5: memref<2x32xf32, #tpu.memory_space<vmem>>, %arg6: memref<2x8xf32, #tpu.memory_space<vmem>>) attributes {dimension_semantics = [], scalar_prefetch = 0 : i64, scratch_operands = 0 : i64, tpu.core_type = #tpu.core_type<tc>} {
    %c0 = arith.constant 0 : index
    %c0_0 = arith.constant 0 : index
    %0 = vector.load %arg0[%c0, %c0_0] : memref<2x32xf32, #tpu.memory_space<vmem>>, vector<2x32xf32>
    %c0_1 = arith.constant 0 : index
    %c0_2 = arith.constant 0 : index
    %1 = vector.load %arg2[%c0_1, %c0_2] : memref<32x128xf32, #tpu.memory_space<vmem>>, vector<32x128xf32>
    %cst = arith.constant dense<0.000000e+00> : vector<2x128xf32>
    %2 = tpu.matmul %0, %1, %cst {dimension_numbers = #tpu.dot_dimension_numbers<[1], [0], [0], [1], [0, 0, 1, 1], [], []>} : vector<2x32xf32>, vector<32x128xf32>, vector<2x128xf32> -> vector<2x128xf32>
    %c0_3 = arith.constant 0 : index
    %c0_4 = arith.constant 0 : index
    %3 = vector.load %arg1[%c0_3, %c0_4] : memref<2x32xf32, #tpu.memory_space<vmem>>, vector<2x32xf32>
    %c0_5 = arith.constant 0 : index
    %c0_6 = arith.constant 0 : index
    %4 = vector.load %arg3[%c0_5, %c0_6] : memref<32x128xf32, #tpu.memory_space<vmem>>, vector<32x128xf32>
    %cst_7 = arith.constant dense<0.000000e+00> : vector<2x128xf32>
    %5 = tpu.matmul %3, %4, %cst_7 {dimension_numbers = #tpu.dot_dimension_numbers<[1], [0], [0], [1], [0, 0, 1, 1], [], []>} : vector<2x32xf32>, vector<32x128xf32>, vector<2x128xf32> -> vector<2x128xf32>
    %6 = arith.addf %2, %5 : vector<2x128xf32>
    %c0_8 = arith.constant 0 : index
    %c0_9 = arith.constant 0 : index
    %7 = vector.load %arg4[%c0_8, %c0_9] : memref<1x128xf32, #tpu.memory_space<vmem>>, vector<1x128xf32>
    %8 = vector.broadcast %7 : vector<1x128xf32> to vector<2x128xf32>
    %9 = arith.addf %6, %8 : vector<2x128xf32>
    %10 = vector.extract_strided_slice %9 {offsets = [0, 0], sizes = [2, 32], strides = [1, 1]} : vector<2x128xf32> to vector<2x32xf32>
    %cst_10 = arith.constant 0.000000e+00 : f32
    %11 = vector.broadcast %cst_10 : f32 to vector<2x32xf32>
    %12 = arith.maximumf %10, %11 : vector<2x32xf32>
    %c0_11 = arith.constant 0 : index
    %c0_12 = arith.constant 0 : index
    %13 = vector.load %arg5[%c0_11, %c0_12] : memref<2x32xf32, #tpu.memory_space<vmem>>, vector<2x32xf32>
    tpu.vector_store %arg5[%c0_11, %c0_12], %12 {strides = array<i32>} : memref<2x32xf32, #tpu.memory_space<vmem>>, vector<2x32xf32>,
    %14 = vector.extract_strided_slice %9 {offsets = [0, 32], sizes = [2, 8], strides = [1, 1]} : vector<2x128xf32> to vector<2x8xf32>
    %cst_13 = arith.constant dense<0xFF800000> : vector<2xf32>
    %15 = vector.multi_reduction <maximumf>, %14, %cst_13 [1] : vector<2x8xf32> to vector<2xf32>
    %16 = vector.shape_cast %15 : vector<2xf32> to vector<2x1xf32>
    %17 = vector.broadcast %16 : vector<2x1xf32> to vector<2x8xf32>
    %18 = arith.subf %14, %17 : vector<2x8xf32>
    %19 = math.exp %18 : vector<2x8xf32>
    %cst_14 = arith.constant dense<0.000000e+00> : vector<2xf32>
    %20 = vector.multi_reduction <add>, %19, %cst_14 [1] : vector<2x8xf32> to vector<2xf32>
    %21 = vector.shape_cast %20 : vector<2xf32> to vector<2x1xf32>
    %22 = tpu.reciprocal %21 {approx = true} : vector<2x1xf32> -> vector<2x1xf32>
    %23 = vector.broadcast %22 : vector<2x1xf32> to vector<2x8xf32>
    %24 = arith.mulf %19, %23 : vector<2x8xf32>
    %c0_15 = arith.constant 0 : index
    %c0_16 = arith.constant 0 : index
    %25 = vector.load %arg6[%c0_15, %c0_16] : memref<2x8xf32, #tpu.memory_space<vmem>>, vector<2x8xf32>
    tpu.vector_store %arg6[%c0_15, %c0_16], %24 {strides = array<i32>} : memref<2x8xf32, #tpu.memory_space<vmem>>, vector<2x8xf32>,
    return
  }
}

</mosaic_0001>

<llo_original>
// kernel: _nascell_call.1
$region0: #{_nascell_call.1}
  #allocation0 [shape = 'u32[]', space=smem, size = 0x4, offset = 0x4, fixed_abs, tag = 'smem constant byte address 0x4 - core index']
  #allocation1 [shape = 'u32[144,128]{1,0:T(1,128)}', space=vmem, size = 0x12000, scoped, tag = 'internal scratch']
  %s0 = inlined_call_operand.hbm [shape: f32[2,32], index: 0, kind: input, shape index: {}]
  %s1 = inlined_call_operand.vmem [shape: f32[2,32], index: 1, kind: input, shape index: {}]
  %s2 = inlined_call_operand.hbm [shape: f32[32,128], index: 2, kind: input, shape index: {}]
  %s3 = inlined_call_operand.hbm [shape: f32[32,128], index: 3, kind: input, shape index: {}]
  %s4 = inlined_call_operand.vmem [shape: f32[1,128], index: 4, kind: input, shape index: {}]
  %s5 = inlined_call_operand.hbm [shape: f32[2,32], index: 5, kind: output, shape index: {0}]
  %s6 = inlined_call_operand.hbm [shape: f32[2,8], index: 6, kind: output, shape index: {1}]
  %7 = xla_tuple %s5, %s6
  %s8 = sld [smem:[#allocation0]]
  $region50: #{_nascell_call.1} parent=0
    _
  %s10 = ssub.s32 1, %s8
  %s11 = scalar_select 0, %s10, %s8
  $region1: #{_nascell_call.1} parent=0
    #allocation2 [shape = 'u8[1024]{0}', space=vmem, size = 0x400, scoped, tag = 'input window, operand 0, single buffered']
    #allocation3 [shape = 's32[1]{0}', space=sflag, size = 0x4, scoped, tag = 'scoped memory for _nascell_call.1']
    #allocation4 [shape = 's32[1]{0}', space=sflag, size = 0x4, scoped, tag = 'scoped memory for _nascell_call.1']
    #allocation5 [shape = 'u8[16384]{0}', space=vmem, size = 0x4000, scoped, tag = 'input window, operand 2, single buffered']
    #allocation6 [shape = 's32[1]{0}', space=sflag, size = 0x4, scoped, tag = 'scoped memory for _nascell_call.1']
    #allocation7 [shape = 'u8[16384]{0}', space=vmem, size = 0x4000, scoped, tag = 'input window, operand 3, single buffered']
    #allocation8 [shape = 'u8[1024]{0}', space=vmem, size = 0x400, scoped, tag = 'output window, operand 0, single buffered']
    #allocation9 [shape = 'u8[1024]{0}', space=vmem, size = 0x400, scoped, tag = 'output window, operand 1, single buffered']
    #allocation10 [shape = 's32[1]{0}', space=sflag, size = 0x4, scoped, tag = 'scoped memory for _nascell_call.1']
    %12 = vsyncpa [#allocation3], 0
    %13 = vsyncpa [#allocation6], 0
    %14 = vsyncpa [#allocation4], 0
    %15 = vsyncpa [#allocation10], 0
    // Predicated region
    $region2: #{_nascell_call.1} parent=1 // pred_check
      _
    $region3: #{_nascell_call.1} parent=1 // pred_check_branch
      %17 = sbr.rel (0) target = $region5
    $region4: #{_nascell_call.1} parent=1 // pred_region
      %s19 = ssub.s32 32, 32
      %20 = vsyncadd [#allocation3], %s19
      %s22 = sshll.u32 [#allocation2], 4
      %s23 = int_to_ptr.vmem [resolvable:$true] %s22
      %25 = dma.hbm_to_vmem [thread:$0]  %s0, 32, %s23, [#allocation3]
    $region5: #{_nascell_call.1} parent=1 // pred_fallthru
      _
    // Predicated region
    $region6: #{_nascell_call.1} parent=1 // pred_check
      _
    $region7: #{_nascell_call.1} parent=1 // pred_check_branch
      %27 = sbr.rel (0) target = $region9
    $region8: #{_nascell_call.1} parent=1 // pred_region
      _
    $region9: #{_nascell_call.1} parent=1 // pred_fallthru
      _
    // Predicated region
    $region10: #{_nascell_call.1} parent=1 // pred_check
      _
    $region11: #{_nascell_call.1} parent=1 // pred_check_branch
      %29 = sbr.rel (0) target = $region13
    $region12: #{_nascell_call.1} parent=1 // pred_region
      %s31 = ssub.s32 512, 512
      %32 = vsyncadd [#allocation6], %s31
      %s33 = sshll.u32 [#allocation5], 4
      %s34 = int_to_ptr.vmem [resolvable:$true] %s33
      %39 = dma.hbm_to_vmem [thread:$0]  %s2, 512, %s34, [#allocation6], 128, 128, 8
    $region13: #{_nascell_call.1} parent=1 // pred_fallthru
      _
    // Predicated region
    $region14: #{_nascell_call.1} parent=1 // pred_check
      _
    $region15: #{_nascell_call.1} parent=1 // pred_check_branch
      %41 = sbr.rel (0) target = $region17
    $region16: #{_nascell_call.1} parent=1 // pred_region
      %s43 = ssub.s32 512, 512
      %44 = vsyncadd [#allocation6], %s43
      %s45 = sshll.u32 [#allocation7], 4
      %s46 = int_to_ptr.vmem [resolvable:$true] %s45
      %51 = dma.hbm_to_vmem [thread:$0]  %s3, 512, %s46, [#allocation6], 128, 128, 8
    $region17: #{_nascell_call.1} parent=1 // pred_fallthru
      _
    // Predicated region
    $region18: #{_nascell_call.1} parent=1 // pred_check
      _
    $region19: #{_nascell_call.1} parent=1 // pred_check_branch
      %53 = sbr.rel (0) target = $region21
    $region20: #{_nascell_call.1} parent=1 // pred_region
      _
    $region21: #{_nascell_call.1} parent=1 // pred_fallthru
      _
    // Predicated region
    $region22: #{_nascell_call.1} parent=1 // pred_check
      _
    $region23: #{_nascell_call.1} parent=1 // pred_check_branch
      %55 = sbr.rel (0) target = $region25
    $region24: #{_nascell_call.1} parent=1 // pred_region
      %56 = dma.done [#allocation3], 32
    $region25: #{_nascell_call.1} parent=1 // pred_fallthru
      _
    // Predicated region
    $region26: #{_nascell_call.1} parent=1 // pred_check
      _
    $region27: #{_nascell_call.1} parent=1 // pred_check_branch
      %58 = sbr.rel (0) target = $region29
    $region28: #{_nascell_call.1} parent=1 // pred_region
      %59 = dma.done [#allocation6], 512
    $region29: #{_nascell_call.1} parent=1 // pred_fallthru
      _
    // Predicated region
    $region30: #{_nascell_call.1} parent=1 // pred_check
      _
    $region31: #{_nascell_call.1} parent=1 // pred_check_branch
      %61 = sbr.rel (0) target = $region33
    $region32: #{_nascell_call.1} parent=1 // pred_region
      %62 = dma.done [#allocation6], 512
    $region33: #{_nascell_call.1} parent=1 // pred_fallthru
      _
    %v63 = vld [vmem:[#allocation2] sm:$0x3]
    %v64 = vld [vmem:[#allocation5] sm:$0xff]
    %v65 = vld [vmem:[#allocation5 + $0x8] sm:$0xff]
    %v66 = vld [vmem:[#allocation5 + $0x10] sm:$0xff]
    %v67 = vld [vmem:[#allocation5 + $0x18] sm:$0xff]
    %v68 = vld [vmem:[%s1] sm:$0x3]
    %v69 = vld [vmem:[#allocation7] sm:$0xff]
    %v70 = vld [vmem:[#allocation7 + $0x8] sm:$0xff]
    %v71 = vld [vmem:[#allocation7 + $0x10] sm:$0xff]
    %v72 = vld [vmem:[#allocation7 + $0x18] sm:$0xff]
    %vm73 = vcmask 261120
    %v75 = vsel %vm73, %v68, 0
    %77 = vmatprep.subr.mxu0 0.0
    %78 = vmatpush1.msra.mxu0 %v69
    %79 = vmatprep.subr.mxu0 0.0
    %80 = vmatpush1.msra.mxu0 %v70
    %81 = vmatprep.subr.mxu0 0.0
    %82 = vmatpush1.msra.mxu0 %v71
    %83 = vmatprep.subr.mxu0 0.0
    %84 = vmatpush1.msra.mxu0 %v72
    %85 = vmatprep.subr.mxu0 0.0
    %86 = vmatpush1.msra.mxu0 0.0
    %87 = vmatprep.subr.mxu0 0.0
    %88 = vmatpush1.msra.mxu0 0.0
    %89 = vmatprep.subr.mxu0 0.0
    %90 = vmatpush1.msra.mxu0 0.0
    %91 = vmatprep.subr.mxu0 0.0
    %92 = vmatpush1.msra.mxu0 0.0
    %93 = vmatprep.subr.mxu0 0.0
    %94 = vmatpush1.msra.mxu0 0.0
    %95 = vmatprep.subr.mxu0 0.0
    %96 = vmatpush1.msra.mxu0 0.0
    %97 = vmatprep.subr.mxu0 0.0
    %98 = vmatpush1.msra.mxu0 0.0
    %99 = vmatprep.subr.mxu0 0.0
    %100 = vmatpush1.msra.mxu0 0.0
    %101 = vmatprep.subr.mxu0 0.0
    %102 = vmatpush1.msra.mxu0 0.0
    %103 = vmatprep.subr.mxu0 0.0
    %104 = vmatpush1.msra.mxu0 0.0
    %105 = vmatprep.subr.mxu0 0.0
    %106 = vmatpush1.msra.mxu0 0.0
    %107 = vmatprep.subr.mxu0 0.0
    %108 = vmatpush1.msra.mxu0 0.0
    %109 = vmatprep.subr.mxu0 0.0
    %110 = vmatpush1.msra.mxu0 0.0
    %111 = vmatprep.subr.mxu0 0.0
    %112 = vmatpush1.msra.mxu0 0.0
    %113 = vmatprep.subr.mxu0 0.0
    %114 = vmatpush1.msra.mxu0 0.0
    %115 = vmatprep.subr.mxu0 0.0
    %116 = vmatpush1.msra.mxu0 0.0
    %117 = vmatprep.subr.mxu0 0.0
    %118 = vmatpush1.msra.mxu0 0.0
    %119 = vmatprep.subr.mxu0 0.0
    %120 = vmatpush1.msra.mxu0 0.0
    %121 = vmatprep.subr.mxu0 0.0
    %122 = vmatpush1.msra.mxu0 0.0
    %123 = vmatprep.subr.mxu0 0.0
    %124 = vmatpush1.msra.mxu0 0.0
    %125 = vmatprep.subr.mxu0 0.0
    %126 = vmatpush1.msra.mxu0 0.0
    %127 = vmatprep.subr.mxu0 0.0
    %128 = vmatpush1.msra.mxu0 0.0
    %129 = vmatprep.subr.mxu0 0.0
    %130 = vmatpush1.msra.mxu0 0.0
    %131 = vmatprep.subr.mxu0 0.0
    %132 = vmatpush1.msra.mxu0 0.0
    %133 = vmatprep.subr.mxu0 0.0
    %134 = vmatpush1.msra.mxu0 0.0
    %135 = vmatprep.subr.mxu0 0.0
    %136 = vmatpush1.msra.mxu0 0.0
    %137 = vmatprep.subr.mxu0 0.0
    %138 = vmatpush1.msra.mxu0 0.0
    %139 = vmatprep.subr.mxu0 0.0
    %140 = vmatpush1.msra.mxu0 0.0
    %141 = vmatprep.mubr.f32.mxu0 0.0
    %142 = vmatmul.mubr.f32.gmra.mrb[0].mxu0 %v75
    %v143 = vpop.f32.mrb[0].mxu0
    %v144 = vadd.f32 0.0, %v143
    %v145 = vpop.f32.mrb[0].mxu0
    %146 = vdwg.mxu0
    %v148 = vsel %vm73, %v63, 0
    %150 = vmatprep.subr.mxu0 0.0
    %151 = vmatpush1.msra.mxu0 %v64
    %152 = vmatprep.subr.mxu0 0.0
    %153 = vmatpush1.msra.mxu0 %v65
    %154 = vmatprep.subr.mxu0 0.0
    %155 = vmatpush1.msra.mxu0 %v66
    %156 = vmatprep.subr.mxu0 0.0
    %157 = vmatpush1.msra.mxu0 %v67
    %158 = vmatprep.subr.mxu0 0.0
    %159 = vmatpush1.msra.mxu0 0.0
    %160 = vmatprep.subr.mxu0 0.0
    %161 = vmatpush1.msra.mxu0 0.0
    %162 = vmatprep.subr.mxu0 0.0
    %163 = vmatpush1.msra.mxu0 0.0
    %164 = vmatprep.subr.mxu0 0.0
    %165 = vmatpush1.msra.mxu0 0.0
    %166 = vmatprep.subr.mxu0 0.0
    %167 = vmatpush1.msra.mxu0 0.0
    %168 = vmatprep.subr.mxu0 0.0
    %169 = vmatpush1.msra.mxu0 0.0
    %170 = vmatprep.subr.mxu0 0.0
    %171 = vmatpush1.msra.mxu0 0.0
    %172 = vmatprep.subr.mxu0 0.0
    %173 = vmatpush1.msra.mxu0 0.0
    %174 = vmatprep.subr.mxu0 0.0
    %175 = vmatpush1.msra.mxu0 0.0
    %176 = vmatprep.subr.mxu0 0.0
    %177 = vmatpush1.msra.mxu0 0.0
    %178 = vmatprep.subr.mxu0 0.0
    %179 = vmatpush1.msra.mxu0 0.0
    %180 = vmatprep.subr.mxu0 0.0
    %181 = vmatpush1.msra.mxu0 0.0
    %182 = vmatprep.subr.mxu0 0.0
    %183 = vmatpush1.msra.mxu0 0.0
    %184 = vmatprep.subr.mxu0 0.0
    %185 = vmatpush1.msra.mxu0 0.0
    %186 = vmatprep.subr.mxu0 0.0
    %187 = vmatpush1.msra.mxu0 0.0
    %188 = vmatprep.subr.mxu0 0.0
    %189 = vmatpush1.msra.mxu0 0.0
    %190 = vmatprep.subr.mxu0 0.0
    %191 = vmatpush1.msra.mxu0 0.0
    %192 = vmatprep.subr.mxu0 0.0
    %193 = vmatpush1.msra.mxu0 0.0
    %194 = vmatprep.subr.mxu0 0.0
    %195 = vmatpush1.msra.mxu0 0.0
    %196 = vmatprep.subr.mxu0 0.0
    %197 = vmatpush1.msra.mxu0 0.0
    %198 = vmatprep.subr.mxu0 0.0
    %199 = vmatpush1.msra.mxu0 0.0
    %200 = vmatprep.subr.mxu0 0.0
    %201 = vmatpush1.msra.mxu0 0.0
    %202 = vmatprep.subr.mxu0 0.0
    %203 = vmatpush1.msra.mxu0 0.0
    %204 = vmatprep.subr.mxu0 0.0
    %205 = vmatpush1.msra.mxu0 0.0
    %206 = vmatprep.subr.mxu0 0.0
    %207 = vmatpush1.msra.mxu0 0.0
    %208 = vmatprep.subr.mxu0 0.0
    %209 = vmatpush1.msra.mxu0 0.0
    %210 = vmatprep.subr.mxu0 0.0
    %211 = vmatpush1.msra.mxu0 0.0
    %212 = vmatprep.subr.mxu0 0.0
    %213 = vmatpush1.msra.mxu0 0.0
    %214 = vmatprep.mubr.f32.mxu0 0.0
    %215 = vmatmul.mubr.f32.gmra.mrb[0].mxu0 %v148
    %v216 = vpop.f32.mrb[0].mxu0
    %v217 = vadd.f32 %v144, %v216
    %v218 = vpop.f32.mrb[0].mxu0
    %219 = vdwg.mxu0
    %v220 = vld [vmem:[%s4] sm:$0x1]
    %v222 = vlaneseq
    %v223 = vshrl.u32 %v222, 7
    %v224 = vsub.s32 0, %v223
    %v225 = vrot.slane %v220, %v224
    %v227 = vadd.f32 %v217, %v225
    %v228 = vmax.f32 %v227, 0.0
    %vm229 = vcmask 254976
    %230 = vst.msk [vmem:[#allocation8] sm:$0x3] %vm229, %v228
    %vm231 = vcmask 320768
    %v232 = vsel %vm231, %v227, -inf
    %233 = vmax.xlane.f32.xlu0 %v232
    %v234 = vpop.xlane.xlu0 %233
    %v235 = vsub.f32 %v227, %v234
    %v236 = vmul.f32 %v235, 1.442695
    %v237 = vpow.pop %v236
    %239 = vrot.lane.b32.xlu0 %v237, 96
    %v240 = vpop.permute.xlu0 %239
    %vm242 = vcmask 58368
    %v243 = vsel %vm242, %v240, 0.0
    %244 = vadd.xlane.f32.xlu0 %v243
    %v245 = vpop.xlane.xlu0 %244
    %v246 = vrcp.pop %v245
    %v247 = vmul.f32 %v237, %v246
    %249 = vrot.lane.b32.xlu0 %v247, 96
    %v250 = vpop.permute.xlu0 %249
    %252 = vst.msk [vmem:[#allocation9] sm:$0x3] %vm242, %v250
    // Predicated region
    $region34: #{_nascell_call.1} parent=1 // pred_check
      _
    $region35: #{_nascell_call.1} parent=1 // pred_check_branch
      %254 = sbr.rel (0) target = $region37
    $region36: #{_nascell_call.1} parent=1 // pred_region
      %s256 = ssub.s32 32, 32
      %257 = vsyncadd [#allocation4], %s256
      %s259 = sshll.u32 [#allocation8], 4
      %s260 = int_to_ptr.vmem [resolvable:$true] %s259
      %262 = dma.vmem_to_hbm [thread:$0]  %s260, 32, %s5, [#allocation4]
    $region37: #{_nascell_call.1} parent=1 // pred_fallthru
      _
    // Predicated region
    $region38: #{_nascell_call.1} parent=1 // pred_check
      _
    $region39: #{_nascell_call.1} parent=1 // pred_check_branch
      %264 = sbr.rel (0) target = $region41
    $region40: #{_nascell_call.1} parent=1 // pred_region
      %s266 = ssub.s32 32, 32
      %267 = vsyncadd [#allocation10], %s266
      %s269 = sshll.u32 [#allocation9], 4
      %s270 = int_to_ptr.vmem [resolvable:$true] %s269
      %272 = dma.vmem_to_hbm [thread:$0]  %s270, 32, %s6, [#allocation10]
    $region41: #{_nascell_call.1} parent=1 // pred_fallthru
      _
    // Predicated region
    $region42: #{_nascell_call.1} parent=1 // pred_check
      _
    $region43: #{_nascell_call.1} parent=1 // pred_check_branch
      %274 = sbr.rel (0) target = $region45
    $region44: #{_nascell_call.1} parent=1 // pred_region
      %275 = dma.done [#allocation4], 32
    $region45: #{_nascell_call.1} parent=1 // pred_fallthru
      _
    // Predicated region
    $region46: #{_nascell_call.1} parent=1 // pred_check
      _
    $region47: #{_nascell_call.1} parent=1 // pred_check_branch
      %277 = sbr.rel (0) target = $region49
    $region48: #{_nascell_call.1} parent=1 // pred_region
      %278 = dma.done [#allocation10], 32
    $region49: #{_nascell_call.1} parent=1 // pred_fallthru
      _
    %279 = vsyncpa [#allocation3], 1
    %280 = vsyncpa [#allocation6], 1
    %281 = vsyncpa [#allocation4], 1
    %282 = vsyncpa [#allocation10], 1

</llo_original>
